<compile_context>
chip_gen: v5e
topology: v5e:2x2
jax: 0.10.0
libtpu: 0.0.40
codegen_flags: <defaults>
</compile_context>

<pallas_src>
import functools

import jax
import jax.numpy as jnp
from jax.experimental import pallas as pl
from jax.experimental.pallas import tpu as pltpu

_NEG_SLOPE = 0.2


def _leaky_relu(x, slope=_NEG_SLOPE):
    return jnp.where(x > 0, x, slope * x)


def _round_up(n, m):
    return ((n + m - 1) // m) * m


# --------------------------------------------------------------------------- #
# Kernel
# --------------------------------------------------------------------------- #
def decoder_kernel(x_ref, w1_ref, b1_ref, w2_ref, b2_ref, w3_ref, b3_ref, out_ref):
    # x_ref:  (tb, latent)          f32 (cast to matmul dtype in-kernel)
    # w1_ref: (latent, hid_pad)     matmul dtype   b1_ref: (1, hid_pad)  f32
    # w2_ref: (hid_pad, hid_pad)    matmul dtype   b2_ref: (1, hid_pad)  f32
    # w3_ref: (hid_pad, out_pad)    matmul dtype   b3_ref: (1, out_pad)  f32
    # out_ref:(tb, out_pad)         f32
    mm_dtype = w1_ref.dtype

    # Layer 1: MXU matmul (f32 accumulation), f32 epilogue.
    x = x_ref[...].astype(mm_dtype)
    h = jnp.dot(x, w1_ref[...], preferred_element_type=jnp.float32)
    h = _leaky_relu(h + b1_ref[...])

    # Layer 2.
    h = jnp.dot(h.astype(mm_dtype), w2_ref[...], preferred_element_type=jnp.float32)
    h = _leaky_relu(h + b2_ref[...])

    # Layer 3 + sigmoid (EUP), lane-dense store.
    o = jnp.dot(h.astype(mm_dtype), w3_ref[...], preferred_element_type=jnp.float32)
    out_ref[...] = jax.nn.sigmoid(o + b3_ref[...]).astype(out_ref.dtype)


# --------------------------------------------------------------------------- #
# One-time parameter preprocessing (hoisted out of the per-call path)
# --------------------------------------------------------------------------- #
def prepare_decoder_params(params, matmul_dtype=jnp.bfloat16):
    """PyTorch (out,in) weights -> (in,out), matmul dtype, lane-padded.

    hidden_dim and output_dim are zero-padded up to multiples of 128 so every
    matmul pass and intermediate is lane-dense. Zero rows/cols are numerically
    neutral: padded hidden units see bias 0 -> LeakyReLU(0) = 0 -> contribute 0.
    """
    hidden_dim, latent_dim = params["w1"].shape
    output_dim = params["w3"].shape[0]
    hid_pad = _round_up(hidden_dim, 128)
    out_pad = _round_up(output_dim, 128)
    dh = hid_pad - hidden_dim
    do = out_pad - output_dim

    w1 = jnp.pad(params["w1"].T.astype(matmul_dtype), ((0, 0), (0, dh)))
    w2 = jnp.pad(params["w2"].T.astype(matmul_dtype), ((0, dh), (0, dh)))
    w3 = jnp.pad(params["w3"].T.astype(matmul_dtype), ((0, dh), (0, do)))
    b1 = jnp.pad(params["b1"].astype(jnp.float32), (0, dh)).reshape(1, hid_pad)
    b2 = jnp.pad(params["b2"].astype(jnp.float32), (0, dh)).reshape(1, hid_pad)
    b3 = jnp.pad(params["b3"].astype(jnp.float32), (0, do)).reshape(1, out_pad)
    return dict(w1=w1, b1=b1, w2=w2, b2=b2, w3=w3, b3=b3)


# --------------------------------------------------------------------------- #
# VMEM sizing
# --------------------------------------------------------------------------- #
def _default_vmem_budget():
    cap = 128 * 1024 * 1024
    try:
        cap = int(pltpu.get_tpu_info().vmem_capacity_bytes)
    except Exception:
        pass
    # Half of physical VMEM: ~64 MiB on v5e/v6e (128 MiB parts), ~32 MiB on v7x.
    return max(32 * 1024 * 1024, min(cap // 2, 96 * 1024 * 1024))


def _vmem_bytes_estimate(tb, latent, hid_pad, out_pad, mm_bytes):
    # Single-buffered weights/biases, double-buffered f32 x/out tiles, live f32
    # intermediates + their matmul-dtype copies, plus Mosaic scratch headroom.
    weights = (latent * hid_pad + hid_pad * hid_pad + hid_pad * out_pad) * mm_bytes
    biases = (2 * hid_pad + out_pad) * 4
    io = 2 * (tb * latent * 4 + tb * out_pad * 4)
    live = tb * hid_pad * (4 + mm_bytes) + tb * max(hid_pad, out_pad) * 4
    headroom = 2 * 1024 * 1024
    return weights + biases + io + live + headroom


# --------------------------------------------------------------------------- #
# Forward wrapper
# --------------------------------------------------------------------------- #
@functools.partial(jax.jit, static_argnames=("output_dim", "tb", "vmem_budget_bytes"))
def decoder_forward(x, prepared, *, output_dim, tb=None, vmem_budget_bytes=None):
    """x: (B, latent_dim) float32. prepared: output of prepare_decoder_params."""
    B, latent_dim = x.shape
    w1, b1 = prepared["w1"], prepared["b1"]
    w2, b2 = prepared["w2"], prepared["b2"]
    w3, b3 = prepared["w3"], prepared["b3"]
    hid_pad = w1.shape[1]
    out_pad = w3.shape[1]
    mm_bytes = jnp.dtype(w1.dtype).itemsize

    if vmem_budget_bytes is None:
        vmem_budget_bytes = _default_vmem_budget()

    # ---- batch tile selection ------------------------------------------- #
    min_tile = 16 if mm_bytes < 4 else 8   # bf16 packs 16 rows / sublane tile
    if tb is None:
        tb = min(512, _round_up(B, min_tile))
    tb = max(min_tile, _round_up(tb, min_tile))
    while tb > min_tile and _vmem_bytes_estimate(
            tb, latent_dim, hid_pad, out_pad, mm_bytes) > vmem_budget_bytes:
        tb = max(min_tile, _round_up(tb // 2, min_tile))
    # v7x has 2 TensorCores: give the "parallel" batch axis >= 2 grid steps
    # whenever there is enough real work to split.
    if (_round_up(B, tb) // tb) < 2 and B > min_tile:
        tb_half = max(min_tile, _round_up((B + 1) // 2, min_tile))
        if _round_up(B, tb_half) // tb_half >= 2:
            tb = tb_half

    vmem_limit = vmem_budget_bytes
    est = _vmem_bytes_estimate(tb, latent_dim, hid_pad, out_pad, mm_bytes)
    if est > vmem_limit:
        # TODO(synk): stream W2/W3 in hidden/output chunks (pltpu.emit_pipeline)
        # when the resident weights alone exceed the VMEM budget (e.g.
        # hidden >= ~4k on v7x); for now just raise the declared limit.
        vmem_limit = est

    # ---- pad batch so any B works with the MXU-friendly tile ------------- #
    B_pad = _round_up(B, tb)
    x_in = x if B_pad == B else jnp.pad(x, ((0, B_pad - B), (0, 0)))

    weight_bytes = (latent_dim * hid_pad + hid_pad * hid_pad + hid_pad * out_pad) * mm_bytes
    cost = pl.CostEstimate(
        flops=2 * B_pad * (latent_dim * hid_pad + hid_pad * hid_pad + hid_pad * out_pad),
        transcendentals=B_pad * out_pad,
        bytes_accessed=weight_bytes + B_pad * latent_dim * 4 + B_pad * out_pad * 4,
    )

    def resident(shape):
        # Grid-invariant weights/biases: single VMEM buffer (no double buffering).
        return pl.BlockSpec(shape, lambda i: (0, 0),
                            pipeline_mode=pl.Buffered(buffer_count=1))

    out_padded = pl.pallas_call(
        decoder_kernel,
        out_shape=jax.ShapeDtypeStruct((B_pad, out_pad), x.dtype),
        grid_spec=pltpu.PrefetchScalarGridSpec(
            num_scalar_prefetch=0,
            grid=(B_pad // tb,),
            in_specs=[
                pl.BlockSpec((tb, latent_dim), lambda i: (i, 0)),  # x tile (f32)
                resident((latent_dim, hid_pad)),                   # W1
                resident((1, hid_pad)),                            # b1
                resident((hid_pad, hid_pad)),                      # W2
                resident((1, hid_pad)),                            # b2
                resident((hid_pad, out_pad)),                      # W3
                resident((1, out_pad)),                            # b3
            ],
            out_specs=pl.BlockSpec((tb, out_pad), lambda i: (i, 0)),
        ),
        compiler_params=pltpu.CompilerParams(
            dimension_semantics=("parallel",),
            vmem_limit_bytes=int(vmem_limit),
        ),
        cost_estimate=cost,
    )(x_in, w1, b1, w2, b2, w3, b3)

    if B_pad == B and out_pad == output_dim:
        return out_padded
    return out_padded[:B, :output_dim]


# --------------------------------------------------------------------------- #
# Synthetic params + pure-JAX reference
# --------------------------------------------------------------------------- #
def init_params(key, latent_dim, hidden_dim, output_dim):
    """Deterministic synthetic init, PyTorch nn.Linear layout (out, in)."""
    ks = jax.random.split(key, 6)

    def lin(kw, kb, fan_in, fan_out):
        bound = 1.0 / jnp.sqrt(fan_in)
        w = jax.random.uniform(kw, (fan_out, fan_in), jnp.float32, -bound, bound)
        b = jax.random.uniform(kb, (fan_out,), jnp.float32, -bound, bound)
        return w, b

    w1, b1 = lin(ks[0], ks[1], latent_dim, hidden_dim)
    w2, b2 = lin(ks[2], ks[3], hidden_dim, hidden_dim)
    w3, b3 = lin(ks[4], ks[5], hidden_dim, output_dim)
    return dict(w1=w1, b1=b1, w2=w2, b2=b2, w3=w3, b3=b3)


def decoder_ref(x, params):
    """Pure-JAX f32 reference mirroring the PyTorch forward."""
    h = x @ params["w1"].T + params["b1"]
    h = jnp.where(h > 0, h, 0.2 * h)
    h = h @ params["w2"].T + params["b2"]
    h = jnp.where(h > 0, h, 0.2 * h)
    o = h @ params["w3"].T + params["b3"]
    return jax.nn.sigmoid(o)


if __name__ == "__main__":
    batch, latent_dim, hidden_dim, output_dim = 8, 16, 32, 64

    key = jax.random.PRNGKey(0)
    kx, kp = jax.random.split(key)
    x = jax.random.normal(kx, (batch, latent_dim), jnp.float32)
    params = init_params(kp, latent_dim, hidden_dim, output_dim)

    ref = decoder_ref(x, params)

    # f32-matmul path: matches the PyTorch/JAX reference to tight tolerance.
    prepared_f32 = prepare_decoder_params(params, matmul_dtype=jnp.float32)
    out_f32 = jax.block_until_ready(
        decoder_forward(x, prepared_f32, output_dim=output_dim))
    assert out_f32.shape == (batch, output_dim)
    assert jnp.allclose(out_f32, ref, atol=1e-5, rtol=1e-5)

    # Default bf16-matmul / f32-epilogue path (MXU-friendly on v6e/v7x).
    prepared_bf16 = prepare_decoder_params(params)
    out_bf16 = jax.block_until_ready(
        decoder_forward(x, prepared_bf16, output_dim=output_dim))
    assert out_bf16.shape == (batch, output_dim)
    assert jnp.allclose(out_bf16, ref, atol=2e-2, rtol=2e-2)

    print("KERNEL_OK")
</pallas_src>

<mosaic_0001>
module attributes {stable_mosaic.version = 11 : i64} {
  func.func @decoder_kernel(%arg0: i32, %arg1: memref<8x16xf32, #tpu.memory_space<vmem>>, %arg2: memref<16x128xf32, #tpu.memory_space<vmem>>, %arg3: memref<1x128xf32, #tpu.memory_space<vmem>>, %arg4: memref<128x128xf32, #tpu.memory_space<vmem>>, %arg5: memref<1x128xf32, #tpu.memory_space<vmem>>, %arg6: memref<128x128xf32, #tpu.memory_space<vmem>>, %arg7: memref<1x128xf32, #tpu.memory_space<vmem>>, %arg8: memref<8x128xf32, #tpu.memory_space<vmem>>) attributes {dimension_semantics = [#tpu.dimension_semantics<parallel>], iteration_bounds = array<i64: 1>, scalar_prefetch = 0 : i64, scratch_operands = 0 : i64, tpu.core_type = #tpu.core_type<tc>, window_params = [{transform_indices = @transform_0, window_bounds = array<i64: 8, 16>}, {pipeline_mode = #tpu.pipeline_mode<synchronous>, transform_indices = @transform_1, window_bounds = array<i64: 16, 128>}, {pipeline_mode = #tpu.pipeline_mode<synchronous>, transform_indices = @transform_2, window_bounds = array<i64: 1, 128>}, {pipeline_mode = #tpu.pipeline_mode<synchronous>, transform_indices = @transform_3, window_bounds = array<i64: 128, 128>}, {pipeline_mode = #tpu.pipeline_mode<synchronous>, transform_indices = @transform_4, window_bounds = array<i64: 1, 128>}, {pipeline_mode = #tpu.pipeline_mode<synchronous>, transform_indices = @transform_5, window_bounds = array<i64: 128, 128>}, {pipeline_mode = #tpu.pipeline_mode<synchronous>, transform_indices = @transform_6, window_bounds = array<i64: 1, 128>}, {transform_indices = @transform_7, window_bounds = array<i64: 8, 128>}]} {
    %c0 = arith.constant 0 : index
    %c0_0 = arith.constant 0 : index
    %0 = vector.load %arg1[%c0, %c0_0] : memref<8x16xf32, #tpu.memory_space<vmem>>, vector<8x16xf32>
    %c0_1 = arith.constant 0 : index
    %c0_2 = arith.constant 0 : index
    %1 = vector.load %arg2[%c0_1, %c0_2] : memref<16x128xf32, #tpu.memory_space<vmem>>, vector<16x128xf32>
    %cst = arith.constant dense<0.000000e+00> : vector<8x128xf32>
    %2 = tpu.matmul %0, %1, %cst {dimension_numbers = #tpu.dot_dimension_numbers<[1], [0], [0], [1], [0, 0, 1, 1], [], []>} : vector<8x16xf32>, vector<16x128xf32>, vector<8x128xf32> -> vector<8x128xf32>
    %c0_3 = arith.constant 0 : index
    %c0_4 = arith.constant 0 : index
    %3 = vector.load %arg3[%c0_3, %c0_4] : memref<1x128xf32, #tpu.memory_space<vmem>>, vector<1x128xf32>
    %4 = vector.broadcast %3 : vector<1x128xf32> to vector<8x128xf32>
    %5 = arith.addf %2, %4 : vector<8x128xf32>
    %cst_5 = arith.constant 0.000000e+00 : f32
    %6 = vector.broadcast %cst_5 : f32 to vector<8x128xf32>
    %7 = arith.cmpf ogt, %5, %6 : vector<8x128xf32>
    %cst_6 = arith.constant 2.000000e-01 : f32
    %8 = vector.broadcast %cst_6 : f32 to vector<8x128xf32>
    %9 = arith.mulf %8, %5 : vector<8x128xf32>
    %10 = arith.select %7, %5, %9 : vector<8x128xi1>, vector<8x128xf32>
    %c0_7 = arith.constant 0 : index
    %c0_8 = arith.constant 0 : index
    %11 = vector.load %arg4[%c0_7, %c0_8] : memref<128x128xf32, #tpu.memory_space<vmem>>, vector<128x128xf32>
    %cst_9 = arith.constant dense<0.000000e+00> : vector<8x128xf32>
    %12 = tpu.matmul %10, %11, %cst_9 {dimension_numbers = #tpu.dot_dimension_numbers<[1], [0], [0], [1], [0, 0, 1, 1], [], []>} : vector<8x128xf32>, vector<128x128xf32>, vector<8x128xf32> -> vector<8x128xf32>
    %c0_10 = arith.constant 0 : index
    %c0_11 = arith.constant 0 : index
    %13 = vector.load %arg5[%c0_10, %c0_11] : memref<1x128xf32, #tpu.memory_space<vmem>>, vector<1x128xf32>
    %14 = vector.broadcast %13 : vector<1x128xf32> to vector<8x128xf32>
    %15 = arith.addf %12, %14 : vector<8x128xf32>
    %cst_12 = arith.constant 0.000000e+00 : f32
    %16 = vector.broadcast %cst_12 : f32 to vector<8x128xf32>
    %17 = arith.cmpf ogt, %15, %16 : vector<8x128xf32>
    %cst_13 = arith.constant 2.000000e-01 : f32
    %18 = vector.broadcast %cst_13 : f32 to vector<8x128xf32>
    %19 = arith.mulf %18, %15 : vector<8x128xf32>
    %20 = arith.select %17, %15, %19 : vector<8x128xi1>, vector<8x128xf32>
    %c0_14 = arith.constant 0 : index
    %c0_15 = arith.constant 0 : index
    %21 = vector.load %arg6[%c0_14, %c0_15] : memref<128x128xf32, #tpu.memory_space<vmem>>, vector<128x128xf32>
    %cst_16 = arith.constant dense<0.000000e+00> : vector<8x128xf32>
    %22 = tpu.matmul %20, %21, %cst_16 {dimension_numbers = #tpu.dot_dimension_numbers<[1], [0], [0], [1], [0, 0, 1, 1], [], []>} : vector<8x128xf32>, vector<128x128xf32>, vector<8x128xf32> -> vector<8x128xf32>
    %c0_17 = arith.constant 0 : index
    %c0_18 = arith.constant 0 : index
    %23 = vector.load %arg7[%c0_17, %c0_18] : memref<1x128xf32, #tpu.memory_space<vmem>>, vector<1x128xf32>
    %24 = vector.broadcast %23 : vector<1x128xf32> to vector<8x128xf32>
    %25 = arith.addf %22, %24 : vector<8x128xf32>
    %26 = arith.negf %25 : vector<8x128xf32>
    %27 = math.exp %26 : vector<8x128xf32>
    %cst_19 = arith.constant 1.000000e+00 : f32
    %28 = vector.broadcast %cst_19 : f32 to vector<8x128xf32>
    %29 = arith.addf %28, %27 : vector<8x128xf32>
    %30 = arith.divf %28, %29 : vector<8x128xf32>
    %c0_20 = arith.constant 0 : index
    %c0_21 = arith.constant 0 : index
    %31 = vector.load %arg8[%c0_20, %c0_21] : memref<8x128xf32, #tpu.memory_space<vmem>>, vector<8x128xf32>
    tpu.vector_store %arg8[%c0_20, %c0_21], %30 {strides = array<i32>} : memref<8x128xf32, #tpu.memory_space<vmem>>, vector<8x128xf32>,
    return
  }
  func.func @transform_0(%arg0: i32) -> (i32, i32) {
    %c0_i32 = arith.constant 0 : i32
    %c0_i32_0 = arith.constant 0 : i32
    return %arg0, %c0_i32 : i32, i32
  }
  func.func @transform_1(%arg0: i32) -> (i32, i32) {
    %c0_i32 = arith.constant 0 : i32
    %c0_i32_0 = arith.constant 0 : i32
    %c0_i32_1 = arith.constant 0 : i32
    return %c0_i32, %c0_i32_0 : i32, i32
  }
  func.func @transform_2(%arg0: i32) -> (i32, i32) {
    %c0_i32 = arith.constant 0 : i32
    %c0_i32_0 = arith.constant 0 : i32
    %c0_i32_1 = arith.constant 0 : i32
    return %c0_i32, %c0_i32_0 : i32, i32
  }
  func.func @transform_3(%arg0: i32) -> (i32, i32) {
    %c0_i32 = arith.constant 0 : i32
    %c0_i32_0 = arith.constant 0 : i32
    %c0_i32_1 = arith.constant 0 : i32
    return %c0_i32, %c0_i32_0 : i32, i32
  }
  func.func @transform_4(%arg0: i32) -> (i32, i32) {
    %c0_i32 = arith.constant 0 : i32
    %c0_i32_0 = arith.constant 0 : i32
    %c0_i32_1 = arith.constant 0 : i32
    return %c0_i32, %c0_i32_0 : i32, i32
  }
  func.func @transform_5(%arg0: i32) -> (i32, i32) {
    %c0_i32 = arith.constant 0 : i32
    %c0_i32_0 = arith.constant 0 : i32
    %c0_i32_1 = arith.constant 0 : i32
    return %c0_i32, %c0_i32_0 : i32, i32
  }
  func.func @transform_6(%arg0: i32) -> (i32, i32) {
    %c0_i32 = arith.constant 0 : i32
    %c0_i32_0 = arith.constant 0 : i32
    %c0_i32_1 = arith.constant 0 : i32
    return %c0_i32, %c0_i32_0 : i32, i32
  }
  func.func @transform_7(%arg0: i32) -> (i32, i32) {
    %c0_i32 = arith.constant 0 : i32
    %c0_i32_0 = arith.constant 0 : i32
    return %arg0, %c0_i32 : i32, i32
  }
}

</mosaic_0001>

<llo_original>
// kernel: decoder_forward.1
$region0: #{decoder_forward.1}
  #allocation0 [shape = 'u32[]', space=smem, size = 0x4, offset = 0x4, fixed_abs, tag = 'smem constant byte address 0x4 - core index']
  #allocation1 [shape = 'u32[72,128]{1,0:T(1,128)}', space=vmem, size = 0x9000, scoped, tag = 'internal scratch']
  %s0 = inlined_call_operand.hbm [shape: f32[8,16], index: 0, kind: input, shape index: {}]
  %s1 = inlined_call_operand.hbm [shape: f32[16,128], index: 1, kind: input, shape index: {}]
  %s2 = inlined_call_operand.hbm [shape: f32[1,128], index: 2, kind: input, shape index: {}]
  %s3 = inlined_call_operand.hbm [shape: f32[128,128], index: 3, kind: input, shape index: {}]
  %s4 = inlined_call_operand.vmem [shape: f32[1,128], index: 4, kind: input, shape index: {}]
  %s5 = inlined_call_operand.hbm [shape: f32[128,128], index: 5, kind: input, shape index: {}]
  %s6 = inlined_call_operand.vmem [shape: f32[1,128], index: 6, kind: input, shape index: {}]
  %s7 = inlined_call_operand.hbm [shape: f32[8,128], index: 7, kind: output, shape index: {}]
  %s8 = sld [smem:[#allocation0]]
  $region58: #{decoder_forward.1} parent=0
    _
  %s10 = ssub.s32 1, %s8
  %s11 = scalar_select 0, %s10, %s8
  $region1: #{decoder_forward.1} parent=0
    #allocation2 [shape = 'u8[4096]{0}', space=vmem, size = 0x1000, scoped, tag = 'input window, operand 0, single buffered']
    #allocation3 [shape = 's32[1]{0}', space=sflag, size = 0x4, scoped, tag = 'scoped memory for decoder_forward.1']
    #allocation4 [shape = 's32[1]{0}', space=sflag, size = 0x4, scoped, tag = 'scoped memory for decoder_forward.1']
    #allocation5 [shape = 'u8[8192]{0}', space=vmem, size = 0x2000, scoped, tag = 'input window, operand 1, single buffered']
    #allocation6 [shape = 's32[1]{0}', space=sflag, size = 0x4, scoped, tag = 'scoped memory for decoder_forward.1']
    #allocation7 [shape = 'u8[512]{0}', space=vmem, size = 0x400, scoped, tag = 'input window, operand 2, single buffered']
    #allocation8 [shape = 'u8[65536]{0}', space=vmem, size = 0x10000, scoped, tag = 'input window, operand 3, single buffered']
    #allocation9 [shape = 's32[1]{0}', space=sflag, size = 0x4, scoped, tag = 'scoped memory for decoder_forward.1']
    #allocation10 [shape = 'u8[65536]{0}', space=vmem, size = 0x10000, scoped, tag = 'input window, operand 5, single buffered']
    #allocation11 [shape = 'u8[4096]{0}', space=vmem, size = 0x1000, scoped, tag = 'output window, operand 0, single buffered']
    %12 = vsyncpa [#allocation3], 0
    %13 = vsyncpa [#allocation6], 0
    %14 = vsyncpa [#allocation9], 0
    %15 = vsyncpa [#allocation4], 0
    // Predicated region
    $region2: #{decoder_forward.1} parent=1 // pred_check
      _
    $region3: #{decoder_forward.1} parent=1 // pred_check_branch
      %17 = sbr.rel (0) target = $region5
    $region4: #{decoder_forward.1} parent=1 // pred_region
      %19 = vsyncadd [#allocation3], 0
      %s21 = sshll.u32 %s0, 4
      %s22 = int_to_ptr.hbm [resolvable:$true] %s21
      %s23 = sshll.u32 [#allocation2], 4
      %s24 = int_to_ptr.vmem [resolvable:$true] %s23
      %26 = dma.hbm_to_vmem [thread:$0]  %s22, 128, %s24, [#allocation3]
    $region5: #{decoder_forward.1} parent=1 // pred_fallthru
      _
    // Predicated region
    $region6: #{decoder_forward.1} parent=1 // pred_check
      _
    $region7: #{decoder_forward.1} parent=1 // pred_check_branch
      %28 = sbr.rel (0) target = $region9
    $region8: #{decoder_forward.1} parent=1 // pred_region
      %30 = vsyncadd [#allocation6], 0
      %s31 = sshll.u32 %s1, 4
      %s32 = int_to_ptr.hbm [resolvable:$true] %s31
      %s33 = sshll.u32 [#allocation5], 4
      %s34 = int_to_ptr.vmem [resolvable:$true] %s33
      %39 = dma.hbm_to_vmem [thread:$0]  %s32, 256, %s34, [#allocation6], 128, 128, 8
    $region9: #{decoder_forward.1} parent=1 // pred_fallthru
      _
    // Predicated region
    $region10: #{decoder_forward.1} parent=1 // pred_check
      _
    $region11: #{decoder_forward.1} parent=1 // pred_check_branch
      %41 = sbr.rel (0) target = $region13
    $region12: #{decoder_forward.1} parent=1 // pred_region
      %43 = vsyncadd [#allocation6], 0
      %s45 = sshll.u32 %s2, 4
      %s46 = int_to_ptr.hbm [resolvable:$true] %s45
      %s47 = sshll.u32 [#allocation7], 4
      %s48 = int_to_ptr.vmem [resolvable:$true] %s47
      %50 = dma.hbm_to_vmem [thread:$0]  %s46, 16, %s48, [#allocation6]
    $region13: #{decoder_forward.1} parent=1 // pred_fallthru
      _
    // Predicated region
    $region14: #{decoder_forward.1} parent=1 // pred_check
      _
    $region15: #{decoder_forward.1} parent=1 // pred_check_branch
      %52 = sbr.rel (0) target = $region17
    $region16: #{decoder_forward.1} parent=1 // pred_region
      %54 = vsyncadd [#allocation9], 0
      %s55 = sshll.u32 %s3, 4
      %s56 = int_to_ptr.hbm [resolvable:$true] %s55
      %s57 = sshll.u32 [#allocation8], 4
      %s58 = int_to_ptr.vmem [resolvable:$true] %s57
      %63 = dma.hbm_to_vmem [thread:$0]  %s56, 2048, %s58, [#allocation9], 128, 128, 8
    $region17: #{decoder_forward.1} parent=1 // pred_fallthru
      _
    // Predicated region
    $region18: #{decoder_forward.1} parent=1 // pred_check
      _
    $region19: #{decoder_forward.1} parent=1 // pred_check_branch
      %65 = sbr.rel (0) target = $region21
    $region20: #{decoder_forward.1} parent=1 // pred_region
      _
    $region21: #{decoder_forward.1} parent=1 // pred_fallthru
      _
    // Predicated region
    $region22: #{decoder_forward.1} parent=1 // pred_check
      _
    $region23: #{decoder_forward.1} parent=1 // pred_check_branch
      %67 = sbr.rel (0) target = $region25
    $region24: #{decoder_forward.1} parent=1 // pred_region
      %69 = vsyncadd [#allocation9], 0
      %s70 = sshll.u32 %s5, 4
      %s71 = int_to_ptr.hbm [resolvable:$true] %s70
      %s72 = sshll.u32 [#allocation10], 4
      %s73 = int_to_ptr.vmem [resolvable:$true] %s72
      %78 = dma.hbm_to_vmem [thread:$0]  %s71, 2048, %s73, [#allocation9], 128, 128, 8
    $region25: #{decoder_forward.1} parent=1 // pred_fallthru
      _
    // Predicated region
    $region26: #{decoder_forward.1} parent=1 // pred_check
      _
    $region27: #{decoder_forward.1} parent=1 // pred_check_branch
      %80 = sbr.rel (0) target = $region29
    $region28: #{decoder_forward.1} parent=1 // pred_region
      _
    $region29: #{decoder_forward.1} parent=1 // pred_fallthru
      _
    // Predicated region
    $region30: #{decoder_forward.1} parent=1 // pred_check
      _
    $region31: #{decoder_forward.1} parent=1 // pred_check_branch
      %82 = sbr.rel (0) target = $region33
    $region32: #{decoder_forward.1} parent=1 // pred_region
      %84 = dma.done [#allocation3], 128
    $region33: #{decoder_forward.1} parent=1 // pred_fallthru
      _
    // Predicated region
    $region34: #{decoder_forward.1} parent=1 // pred_check
      _
    $region35: #{decoder_forward.1} parent=1 // pred_check_branch
      %86 = sbr.rel (0) target = $region37
    $region36: #{decoder_forward.1} parent=1 // pred_region
      %88 = dma.done [#allocation6], 256
    $region37: #{decoder_forward.1} parent=1 // pred_fallthru
      _
    // Predicated region
    $region38: #{decoder_forward.1} parent=1 // pred_check
      _
    $region39: #{decoder_forward.1} parent=1 // pred_check_branch
      %90 = sbr.rel (0) target = $region41
    $region40: #{decoder_forward.1} parent=1 // pred_region
      %92 = dma.done [#allocation6], 16
    $region41: #{decoder_forward.1} parent=1 // pred_fallthru
      _
    // Predicated region
    $region42: #{decoder_forward.1} parent=1 // pred_check
      _
    $region43: #{decoder_forward.1} parent=1 // pred_check_branch
      %94 = sbr.rel (0) target = $region45
    $region44: #{decoder_forward.1} parent=1 // pred_region
      %96 = dma.done [#allocation9], 2048
    $region45: #{decoder_forward.1} parent=1 // pred_fallthru
      _
    // Predicated region
    $region46: #{decoder_forward.1} parent=1 // pred_check
      _
    $region47: #{decoder_forward.1} parent=1 // pred_check_branch
      %98 = sbr.rel (0) target = $region49
    $region48: #{decoder_forward.1} parent=1 // pred_region
      %100 = dma.done [#allocation9], 2048
    $region49: #{decoder_forward.1} parent=1 // pred_fallthru
      _
    %v101 = vld [vmem:[#allocation2] sm:$0xff]
    %v102 = vld [vmem:[#allocation5] sm:$0xff]
    %v103 = vld [vmem:[#allocation5 + $0x8] sm:$0xff]
    %v104 = vld [vmem:[#allocation7] sm:$0x1]
    %v106 = vperm.slane %v104, 0
    %vm108 = vcmask 130048
    %v110 = vsel %vm108, %v101, 0
    %112 = vmatpush.msra.mxu0 0.0
    %113 = vmatpush.msra.mxu0 0.0
    %114 = vmatpush.msra.mxu0 0.0
    %115 = vmatpush.msra.mxu0 0.0
    %116 = vmatpush.msra.mxu0 0.0
    %117 = vmatpush.msra.mxu0 0.0
    %118 = vmatpush.msra.mxu0 0.0
    %119 = vmatpush.msra.mxu0 0.0
    %120 = vmatpush.msra.mxu0 0.0
    %121 = vmatpush.msra.mxu0 0.0
    %122 = vmatpush.msra.mxu0 0.0
    %123 = vmatpush.msra.mxu0 0.0
    %124 = vmatpush.msra.mxu0 0.0
    %125 = vmatpush.msra.mxu0 0.0
    %126 = vmatpush.msra.mxu0 %v103
    %127 = vmatpush.msra.mxu0 %v102
    %128 = vmatmul.f32.gmra.mxu0 %v110
    %v129 = vpop.f32.mrf.mxu0
    %v130 = vadd.f32 %v106, %v129
    %131 = vdwg.mxu0
    %vm132 = vcmp.gt.f32.partialorder %v130, 0.0
    %v133 = vmul.f32 %v130, 0.2
    %v134 = vsel %vm132, %v130, %v133
    %v135 = vld [vmem:[#allocation8] sm:$0xff]
    %v136 = vld [vmem:[#allocation8 + $0x8] sm:$0xff]
    %v137 = vld [vmem:[#allocation8 + $0x10] sm:$0xff]
    %v138 = vld [vmem:[#allocation8 + $0x18] sm:$0xff]
    %v139 = vld [vmem:[#allocation8 + $0x20] sm:$0xff]
    %v140 = vld [vmem:[#allocation8 + $0x28] sm:$0xff]
    %v141 = vld [vmem:[#allocation8 + $0x30] sm:$0xff]
    %v142 = vld [vmem:[#allocation8 + $0x38] sm:$0xff]
    %v143 = vld [vmem:[#allocation8 + $0x40] sm:$0xff]
    %v144 = vld [vmem:[#allocation8 + $0x48] sm:$0xff]
    %v145 = vld [vmem:[#allocation8 + $0x50] sm:$0xff]
    %v146 = vld [vmem:[#allocation8 + $0x58] sm:$0xff]
    %v147 = vld [vmem:[#allocation8 + $0x60] sm:$0xff]
    %v148 = vld [vmem:[#allocation8 + $0x68] sm:$0xff]
    %v149 = vld [vmem:[#allocation8 + $0x70] sm:$0xff]
    %v150 = vld [vmem:[#allocation8 + $0x78] sm:$0xff]
    %v151 = vld [vmem:[%s4] sm:$0x1]
    %v153 = vperm.slane %v151, 0
    %155 = vmatpush.msra.mxu0 %v150
    %156 = vmatpush.msra.mxu0 %v149
    %157 = vmatpush.msra.mxu0 %v148
    %158 = vmatpush.msra.mxu0 %v147
    %159 = vmatpush.msra.mxu0 %v146
    %160 = vmatpush.msra.mxu0 %v145
    %161 = vmatpush.msra.mxu0 %v144
    %162 = vmatpush.msra.mxu0 %v143
    %163 = vmatpush.msra.mxu0 %v142
    %164 = vmatpush.msra.mxu0 %v141
    %165 = vmatpush.msra.mxu0 %v140
    %166 = vmatpush.msra.mxu0 %v139
    %167 = vmatpush.msra.mxu0 %v138
    %168 = vmatpush.msra.mxu0 %v137
    %169 = vmatpush.msra.mxu0 %v136
    %170 = vmatpush.msra.mxu0 %v135
    %171 = vmatmul.f32.gmra.mxu0 %v134
    %v172 = vpop.f32.mrf.mxu0
    %v173 = vadd.f32 %v153, %v172
    %174 = vdwg.mxu0
    %vm175 = vcmp.gt.f32.partialorder %v173, 0.0
    %v176 = vmul.f32 %v173, 0.2
    %v177 = vsel %vm175, %v173, %v176
    %v178 = vld [vmem:[#allocation10] sm:$0xff]
    %v179 = vld [vmem:[#allocation10 + $0x8] sm:$0xff]
    %v180 = vld [vmem:[#allocation10 + $0x10] sm:$0xff]
    %v181 = vld [vmem:[#allocation10 + $0x18] sm:$0xff]
    %v182 = vld [vmem:[#allocation10 + $0x20] sm:$0xff]
    %v183 = vld [vmem:[#allocation10 + $0x28] sm:$0xff]
    %v184 = vld [vmem:[#allocation10 + $0x30] sm:$0xff]
    %v185 = vld [vmem:[#allocation10 + $0x38] sm:$0xff]
    %v186 = vld [vmem:[#allocation10 + $0x40] sm:$0xff]
    %v187 = vld [vmem:[#allocation10 + $0x48] sm:$0xff]
    %v188 = vld [vmem:[#allocation10 + $0x50] sm:$0xff]
    %v189 = vld [vmem:[#allocation10 + $0x58] sm:$0xff]
    %v190 = vld [vmem:[#allocation10 + $0x60] sm:$0xff]
    %v191 = vld [vmem:[#allocation10 + $0x68] sm:$0xff]
    %v192 = vld [vmem:[#allocation10 + $0x70] sm:$0xff]
    %v193 = vld [vmem:[#allocation10 + $0x78] sm:$0xff]
    %v194 = vld [vmem:[%s6] sm:$0x1]
    %v196 = vperm.slane %v194, 0
    %198 = vmatpush.msra.mxu0 %v193
    %199 = vmatpush.msra.mxu0 %v192
    %200 = vmatpush.msra.mxu0 %v191
    %201 = vmatpush.msra.mxu0 %v190
    %202 = vmatpush.msra.mxu0 %v189
    %203 = vmatpush.msra.mxu0 %v188
    %204 = vmatpush.msra.mxu0 %v187
    %205 = vmatpush.msra.mxu0 %v186
    %206 = vmatpush.msra.mxu0 %v185
    %207 = vmatpush.msra.mxu0 %v184
    %208 = vmatpush.msra.mxu0 %v183
    %209 = vmatpush.msra.mxu0 %v182
    %210 = vmatpush.msra.mxu0 %v181
    %211 = vmatpush.msra.mxu0 %v180
    %212 = vmatpush.msra.mxu0 %v179
    %213 = vmatpush.msra.mxu0 %v178
    %214 = vmatmul.f32.gmra.mxu0 %v177
    %v215 = vpop.f32.mrf.mxu0
    %v216 = vadd.f32 %v196, %v215
    %217 = vdwg.mxu0
    %v218 = vxor.u32 %v216, 2147483648
    %v219 = vmul.f32 %v218, 1.442695
    %v220 = vpow.pop %v219
    %v221 = vadd.f32 %v220, 1.0
    %v222 = vrcp.pop %v221
    %v223 = vmul.f32 %v221, %v222
    %v224 = vsub.f32 1.0, %v223
    %v225 = vmul.f32 %v222, %v224
    %v226 = vadd.f32 %v222, %v225
    %vm227 = vweird.f32 %v221
    %vm228 = vweird.f32 %v222
    %vm229 = vmor %vm227, %vm228
    %v230 = vsel %vm229, %v222, %v226
    %v231 = vand.u32 2147483647, %v221
    %vm232 = vcmp.eq.f32.partialorder %v231, 8.507059e+37
    %v233 = vand.u32 %v221, 2147483648
    %v234 = vor.u32 1.1754944e-38, %v233
    %v235 = vsel %vm232, %v234, %v230
    %v236 = vmul.f32 1.0, %v235
    %237 = vst [vmem:[#allocation11] sm:$0xff] %v236
    // Predicated region
    $region50: #{decoder_forward.1} parent=1 // pred_check
      _
    $region51: #{decoder_forward.1} parent=1 // pred_check_branch
      %239 = sbr.rel (0) target = $region53
    $region52: #{decoder_forward.1} parent=1 // pred_region
      %241 = vsyncadd [#allocation4], 0
      %s243 = sshll.u32 [#allocation11], 4
      %s244 = int_to_ptr.vmem [resolvable:$true] %s243
      %s245 = sshll.u32 %s7, 4
      %s246 = int_to_ptr.hbm [resolvable:$true] %s245
      %248 = dma.vmem_to_hbm [thread:$0]  %s244, 128, %s246, [#allocation4]
    $region53: #{decoder_forward.1} parent=1 // pred_fallthru
      _
    // Predicated region
    $region54: #{decoder_forward.1} parent=1 // pred_check
      _
    $region55: #{decoder_forward.1} parent=1 // pred_check_branch
      %250 = sbr.rel (0) target = $region57
    $region56: #{decoder_forward.1} parent=1 // pred_region
      %252 = dma.done [#allocation4], 128
    $region57: #{decoder_forward.1} parent=1 // pred_fallthru
      _
    %253 = vsyncpa [#allocation3], 1
    %254 = vsyncpa [#allocation6], 1
    %255 = vsyncpa [#allocation9], 1
    %256 = vsyncpa [#allocation4], 1

</llo_original>
